<compile_context>
chip_gen: v6e
topology: v6e:2x2x1
jax: 0.10.0
libtpu: 0.0.40
codegen_flags: <defaults>
</compile_context>

<pallas_src>
import functools

import jax
import jax.numpy as jnp
from jax.experimental import pallas as pl
from jax.experimental.pallas import tpu as pltpu

IN_FEATURES = 11

# Rows per grid step.  Each row of x occupies 512 B in the (8,128)-tiled
# HBM/VMEM layout, so 8192 rows ~= 4 MiB per step; double-buffered input +
# output blocks total ~16 MiB of VMEM.
_DEFAULT_TILE_M = 8192
_MAX_TILE_M = 8192


def _round_up(x, m):
    return ((x + m - 1) // m) * m


def _linear_kernel(x_ref, w_ref, b_ref, o_ref):
    # x_ref: (tile_m, F) VMEM block of X (batch-major; F = full minor dim)
    # w_ref: (1, F)      f32 VMEM weight row (sublane-broadcast)
    # b_ref: (1, 1)      f32 SMEM scalar bias
    # o_ref: (tile_m, 1) f32 VMEM output block
    x = x_ref[...].astype(jnp.float32)            # in-kernel upcast (bf16-safe)
    prod = x * w_ref[...]                         # VPU broadcast multiply
    y = jnp.sum(prod, axis=1, keepdims=True)      # XLU reduce over the 11 lanes
    o_ref[...] = (y + b_ref[0, 0]).astype(o_ref.dtype)


@functools.partial(jax.jit, static_argnames=("tile_m",))
def one_layer_nn_forward_pallas(x, weight, bias, *, tile_m=_DEFAULT_TILE_M):
    """nn.Linear(F, 1) forward via a single Pallas kernel.

    x: [n, F]; weight: [1, F] (torch layout); bias: [1]  ->  [n, 1] f32.
    """
    n, f = x.shape
    w_row = weight.astype(jnp.float32).reshape(1, f)
    b = bias.astype(jnp.float32).reshape(1, 1)    # scalar, lives in SMEM

    # Tile the batch (sublane) axis.  tile_m must be a multiple of 8; the
    # minor dim F is the full array extent so no 128-divisibility is needed.
    tile_m = int(tile_m)
    tile_m = max(8, min(_round_up(tile_m, 8), _MAX_TILE_M, _round_up(n, 8)))
    num_tiles = -(-n // tile_m)
    # v7x megacore: a single big tile would idle one TensorCore; split large
    # single-tile batches into two balanced tiles.
    if num_tiles == 1 and n >= 4096:
        tile_m = _round_up(-(-n // 2), 8)
        num_tiles = -(-n // tile_m)

    return pl.pallas_call(
        _linear_kernel,
        out_shape=jax.ShapeDtypeStruct((n, 1), jnp.float32),
        grid=(num_tiles,),
        in_specs=[
            pl.BlockSpec((tile_m, f), lambda i: (i, 0)),           # X block
            pl.BlockSpec((1, f), lambda i: (0, 0)),                # weight row
            pl.BlockSpec(memory_space=pltpu.MemorySpace.SMEM),     # bias scalar
        ],
        out_specs=pl.BlockSpec((tile_m, 1), lambda i: (i, 0)),
        compiler_params=pltpu.CompilerParams(
            dimension_semantics=("parallel",),
            vmem_limit_bytes=32 * 1024 * 1024,
        ),
    )(x, w_row, b)


@functools.partial(jax.jit, static_argnames=("tile_m", "small_n_threshold"))
def one_layer_nn_forward(x, weight, bias, *, tile_m=_DEFAULT_TILE_M,
                         small_n_threshold=2048):
    """Dispatcher: tiny batches use a fused XLA matmul (the pallas_call launch
    is pure overhead there); larger batches use the Pallas kernel."""
    n = x.shape[0]
    if n < small_n_threshold:
        return (x.astype(jnp.float32) @ weight.astype(jnp.float32).T
                + bias.astype(jnp.float32))
    return one_layer_nn_forward_pallas(x, weight, bias, tile_m=tile_m)


if __name__ == "__main__":
    key = jax.random.PRNGKey(0)
    kx, kw, kb = jax.random.split(key, 3)

    n = 300  # small batch; deliberately not a multiple of 8 or 128
    x = jax.random.normal(kx, (n, IN_FEATURES), dtype=jnp.float32)

    # Deterministic parameters matching torch.nn.Linear's default
    # U(-1/sqrt(F), 1/sqrt(F)) init distribution (values are synthetic).
    bound = 1.0 / (IN_FEATURES ** 0.5)
    weight = jax.random.uniform(kw, (1, IN_FEATURES), jnp.float32,
                                minval=-bound, maxval=bound)
    bias = jax.random.uniform(kb, (1,), jnp.float32,
                              minval=-bound, maxval=bound)

    # Plain-JAX reference of nn.Linear semantics.
    ref = x @ weight.T + bias

    # Pallas kernel, multi-tile (grid > 1, exercises the partial tail block).
    out_multi = jax.block_until_ready(
        one_layer_nn_forward_pallas(x, weight, bias, tile_m=128))
    # Pallas kernel, default tiling (single tile clamped to the batch).
    out_single = jax.block_until_ready(
        one_layer_nn_forward_pallas(x, weight, bias))
    # Dispatcher (small n -> XLA fast path).
    out_disp = jax.block_until_ready(one_layer_nn_forward(x, weight, bias))

    for out in (out_multi, out_single, out_disp):
        assert out.shape == (n, 1)
        assert jnp.allclose(out, ref, atol=1e-5, rtol=1e-5)

    print("KERNEL_OK")
</pallas_src>

<mosaic_0001>
module attributes {stable_mosaic.version = 11 : i64} {
  func.func @_linear_kernel(%arg0: i32, %arg1: memref<128x11xf32, #tpu.memory_space<vmem>>, %arg2: memref<1x11xf32, #tpu.memory_space<vmem>>, %arg3: memref<1x1xf32, #tpu.memory_space<smem>>, %arg4: memref<128x1xf32, #tpu.memory_space<vmem>>) attributes {dimension_semantics = [#tpu.dimension_semantics<parallel>], iteration_bounds = array<i64: 3>, scalar_prefetch = 0 : i64, scratch_operands = 0 : i64, tpu.core_type = #tpu.core_type<tc>, window_params = [{transform_indices = @transform_0, window_bounds = array<i64: 128, 11>}, {pipeline_mode = #tpu.pipeline_mode<synchronous>, transform_indices = @transform_1, window_bounds = array<i64: 1, 11>}, {transform_indices = @transform_2, window_bounds = array<i64: 1, 1>}, {transform_indices = @transform_3, window_bounds = array<i64: 128, 1>}]} {
    %c0 = arith.constant 0 : index
    %c0_0 = arith.constant 0 : index
    %0 = vector.load %arg1[%c0, %c0_0] : memref<128x11xf32, #tpu.memory_space<vmem>>, vector<128x11xf32>
    %c0_1 = arith.constant 0 : index
    %c0_2 = arith.constant 0 : index
    %1 = vector.load %arg2[%c0_1, %c0_2] : memref<1x11xf32, #tpu.memory_space<vmem>>, vector<1x11xf32>
    %2 = vector.broadcast %1 : vector<1x11xf32> to vector<128x11xf32>
    %3 = arith.mulf %0, %2 : vector<128x11xf32>
    %cst = arith.constant dense<0.000000e+00> : vector<128xf32>
    %4 = vector.multi_reduction <add>, %3, %cst [1] : vector<128x11xf32> to vector<128xf32>
    %5 = vector.shape_cast %4 : vector<128xf32> to vector<128x1xf32>
    %c0_3 = arith.constant 0 : index
    %c0_4 = arith.constant 0 : index
    %6 = memref.load %arg3[%c0_3, %c0_4] : memref<1x1xf32, #tpu.memory_space<smem>>
    %7 = vector.broadcast %6 : f32 to vector<128x1xf32>
    %8 = arith.addf %5, %7 : vector<128x1xf32>
    %c0_5 = arith.constant 0 : index
    %c0_6 = arith.constant 0 : index
    %9 = vector.load %arg4[%c0_5, %c0_6] : memref<128x1xf32, #tpu.memory_space<vmem>>, vector<128x1xf32>
    tpu.vector_store %arg4[%c0_5, %c0_6], %8 {strides = array<i32>} : memref<128x1xf32, #tpu.memory_space<vmem>>, vector<128x1xf32>,
    return
  }
  func.func @transform_0(%arg0: i32) -> (i32, i32) {
    %c0_i32 = arith.constant 0 : i32
    %c0_i32_0 = arith.constant 0 : i32
    return %arg0, %c0_i32 : i32, i32
  }
  func.func @transform_1(%arg0: i32) -> (i32, i32) {
    %c0_i32 = arith.constant 0 : i32
    %c0_i32_0 = arith.constant 0 : i32
    %c0_i32_1 = arith.constant 0 : i32
    return %c0_i32, %c0_i32_0 : i32, i32
  }
  func.func @transform_2(%arg0: i32) -> (i32, i32) {
    %c0_i32 = arith.constant 0 : i32
    %c0_i32_0 = arith.constant 0 : i32
    %c0_i32_1 = arith.constant 0 : i32
    return %c0_i32, %c0_i32_0 : i32, i32
  }
  func.func @transform_3(%arg0: i32) -> (i32, i32) {
    %c0_i32 = arith.constant 0 : i32
    %c0_i32_0 = arith.constant 0 : i32
    return %arg0, %c0_i32 : i32, i32
  }
}

</mosaic_0001>

<llo_original>
// kernel: one_layer_nn_forward_pallas.1
$region0: #{one_layer_nn_forward_pallas.1}
  #allocation0 [shape = 'u32[]', space=smem, size = 0x4, offset = 0x4, fixed_abs, tag = 'smem constant byte address 0x4 - core index']
  #allocation1 [shape = 'u32[144,128]{1,0:T(1,128)}', space=vmem, size = 0x12000, scoped, tag = 'internal scratch']
  #allocation2 [shape = 'f32[1,1]{1,0:T(1,128)S(6)}', space=smem, size = 0x200, scoped, tag = 'scoped memory for one_layer_nn_forward_pallas.1']
  %s0 = inlined_call_operand.vmem [shape: f32[300,11], index: 0, kind: input, shape index: {}]
  %s1 = inlined_call_operand.vmem [shape: f32[1,11], index: 1, kind: input, shape index: {}]
  %s2 = inlined_call_operand.<no memory space> [shape: f32[1,1], index: 2, kind: input, shape index: {}]
  %s3 = inlined_call_operand.vmem [shape: f32[300,1], index: 3, kind: output, shape index: {}]
  %s4 = sld [smem:[#allocation0]]
  $region93: #{one_layer_nn_forward_pallas.1} parent=0
    _
  %s6 = ssub.s32 1, %s4
  %s7 = scalar_select 0, %s6, %s4
  %8 = sst [smem:[#allocation2]] %s2
  $region1: #{one_layer_nn_forward_pallas.1} parent=0
    #allocation3 [shape = 'u8[131072]{0}', space=vmem, size = 0x20000, scoped, tag = 'output window, operand 0']
    loop: start=0, step=1, limit=5
    $region2: #{one_layer_nn_forward_pallas.1} parent=1 // loop_pre_header
      _
    $region3: #{one_layer_nn_forward_pallas.1} parent=1 // loop_header
      %s10 = sphi 0, %s14
      %p11 = scmp.ge.s32.totalorder %s10, 5
      %s20 = sphi 0, %s22
      %s23 = sphi 0, %s20
      %s24 = sphi 0, %s23
      %s40 = sphi 0, %s24
      %s44 = sphi 0, %s44
      %s46 = sphi 0, %s44
      %s47 = sphi 0, %s46
      %s61 = sphi 0, %s47
      %s65 = sphi 0, %s65
      %s67 = sphi 0, %s65
      %s68 = sphi 0, %s67
      %s82 = sphi 0, %s68
      %s88 = sphi 0, %s90
      %s91 = sphi 0, %s88
      %s92 = sphi 0, %s91
      %s108 = sphi 0, %s92
    $region4: #{one_layer_nn_forward_pallas.1} parent=1 // loop_header_branch
      %13 = sbr.rel (%p11) target = $region8
    $region5: #{one_layer_nn_forward_pallas.1} parent=1 // loop_body
      %s15 = ssub.s32 %s10, 1
      %s16 = ssub.s32 %s10, 2
      %s17 = sadd.s32 %s10, 1
      %s18 = ssub.s32 %s10, %s17
      %p19 = scmp.eq.s32.totalorder %s18, 0
      %s21 = sadd.s32 %s20, 1
      %s22 = scalar_select %p19, %s20, %s21
      %p25 = pneg %p19
      %p26 = scmp.eq.s32.totalorder %s10, 2
      %p27 = por %p25, %p26
      %p28 = scmp.ne.s32.totalorder %s20, %s23
      %p29 = scmp.eq.s32.totalorder %s10, 0
      %p30 = por %p28, %p29
      %p31 = scmp.ne.s32.totalorder %s20, %s23
      %p32 = scmp.eq.s32.totalorder %s15, 2
      %p33 = por %p31, %p32
      %p34 = scmp.ne.s32.totalorder %s23, %s24
      %p35 = scmp.eq.s32.totalorder %s15, 0
      %p36 = por %p34, %p35
      %p37 = scmp.ne.s32.totalorder %s23, %s24
      %p38 = scmp.eq.s32.totalorder %s16, 2
      %p39 = por %p37, %p38
      %p41 = scmp.ne.s32.totalorder %s24, %s40
      %p42 = scmp.eq.s32.totalorder %s16, 0
      %p43 = por %p41, %p42
      %s45 = sadd.s32 %s44, 1
      %p48 = scmp.eq.s32.totalorder %s10, 2
      %p49 = scmp.ne.s32.totalorder %s44, %s46
      %p50 = scmp.eq.s32.totalorder %s10, 0
      %p51 = por %p49, %p50
      %p52 = scmp.ne.s32.totalorder %s44, %s46
      %p53 = scmp.eq.s32.totalorder %s15, 2
      %p54 = por %p52, %p53
      %p55 = scmp.ne.s32.totalorder %s46, %s47
      %p56 = scmp.eq.s32.totalorder %s15, 0
      %p57 = por %p55, %p56
      %p58 = scmp.ne.s32.totalorder %s46, %s47
      %p59 = scmp.eq.s32.totalorder %s16, 2
      %p60 = por %p58, %p59
      %p62 = scmp.ne.s32.totalorder %s47, %s61
      %p63 = scmp.eq.s32.totalorder %s16, 0
      %p64 = por %p62, %p63
      %s66 = sadd.s32 %s65, 1
      %p69 = scmp.eq.s32.totalorder %s10, 2
      %p70 = scmp.ne.s32.totalorder %s65, %s67
      %p71 = scmp.eq.s32.totalorder %s10, 0
      %p72 = por %p70, %p71
      %p73 = scmp.ne.s32.totalorder %s65, %s67
      %p74 = scmp.eq.s32.totalorder %s15, 2
      %p75 = por %p73, %p74
      %p76 = scmp.ne.s32.totalorder %s67, %s68
      %p77 = scmp.eq.s32.totalorder %s15, 0
      %p78 = por %p76, %p77
      %p79 = scmp.ne.s32.totalorder %s67, %s68
      %p80 = scmp.eq.s32.totalorder %s16, 2
      %p81 = por %p79, %p80
      %p83 = scmp.ne.s32.totalorder %s68, %s82
      %p84 = scmp.eq.s32.totalorder %s16, 0
      %p85 = por %p83, %p84
      %s86 = ssub.s32 %s10, %s17
      %p87 = scmp.eq.s32.totalorder %s86, 0
      %s89 = sadd.s32 %s88, 1
      %s90 = scalar_select %p87, %s88, %s89
      %p93 = pneg %p87
      %p94 = scmp.eq.s32.totalorder %s10, 2
      %p95 = por %p93, %p94
      %p96 = scmp.ne.s32.totalorder %s88, %s91
      %p97 = scmp.eq.s32.totalorder %s10, 0
      %p98 = por %p96, %p97
      %p99 = scmp.ne.s32.totalorder %s88, %s91
      %p100 = scmp.eq.s32.totalorder %s15, 2
      %p101 = por %p99, %p100
      %p102 = scmp.ne.s32.totalorder %s91, %s92
      %p103 = scmp.eq.s32.totalorder %s15, 0
      %p104 = por %p102, %p103
      %p105 = scmp.ne.s32.totalorder %s91, %s92
      %p106 = scmp.eq.s32.totalorder %s16, 2
      %p107 = por %p105, %p106
      %p109 = scmp.ne.s32.totalorder %s92, %s108
      %p110 = scmp.eq.s32.totalorder %s16, 0
      %p111 = por %p109, %p110
      %p112 = scmp.le.s32.totalorder 1, %s10
      %p113 = scmp.lt.s32.totalorder %s10, 4
      %p114 = pnand %p112, %p113
      %p115 = pneg %p114
      // Predicated region
      $region9: #{one_layer_nn_forward_pallas.1} parent=5 // pred_check
        _
      $region10: #{one_layer_nn_forward_pallas.1} parent=5 // pred_check_branch
        %117 = sbr.rel (%p114) target = $region12
      $region11: #{one_layer_nn_forward_pallas.1} parent=5 // pred_region
        %s118 = ssub.s32 %s10, 1
        // Predicated region
        $region13: #{one_layer_nn_forward_pallas.1} parent=11 // pred_check
          %p119 = pneg %p57
        $region14: #{one_layer_nn_forward_pallas.1} parent=11 // pred_check_branch
          %121 = sbr.rel (%p119) target = $region16
        $region15: #{one_layer_nn_forward_pallas.1} parent=11 // pred_region
          _
        $region16: #{one_layer_nn_forward_pallas.1} parent=11 // pred_fallthru
          _
        // Predicated region
        $region17: #{one_layer_nn_forward_pallas.1} parent=11 // pred_check
          %p122 = pneg %p78
        $region18: #{one_layer_nn_forward_pallas.1} parent=11 // pred_check_branch
          %124 = sbr.rel (%p122) target = $region20
        $region19: #{one_layer_nn_forward_pallas.1} parent=11 // pred_region
          _
        $region20: #{one_layer_nn_forward_pallas.1} parent=11 // pred_fallthru
          _
      $region12: #{one_layer_nn_forward_pallas.1} parent=5 // pred_fallthru
        _
      %p125 = scmp.lt.s32.totalorder %s10, 3
      // Predicated region
      $region21: #{one_layer_nn_forward_pallas.1} parent=5 // pred_check
        %p126 = pneg %p125
      $region22: #{one_layer_nn_forward_pallas.1} parent=5 // pred_check_branch
        %128 = sbr.rel (%p126) target = $region24
      $region23: #{one_layer_nn_forward_pallas.1} parent=5 // pred_region
        // Predicated region
        $region25: #{one_layer_nn_forward_pallas.1} parent=23 // pred_check
          %p129 = pneg %p30
        $region26: #{one_layer_nn_forward_pallas.1} parent=23 // pred_check_branch
          %131 = sbr.rel (%p129) target = $region28
        $region27: #{one_layer_nn_forward_pallas.1} parent=23 // pred_region
          %s132 = smul.u32 16, %s10
          %s133 = ssub.s32 38, %s132
          %p134 = scmp.lt.s32.totalorder %s133, 16
          %s135 = scalar_select %p134, %s133, 16
          %s136 = smul.u32 128, %s135
          %p137 = scmp.lt.s32.totalorder %s132, 37
          %s138 = scalar_select %p137, %s132, 37
          %s139 = smul.addr %s138, 8
          %s140 = scalar_lea.vmem %s0, %s139
          %s141 = smul.u32 16, %s10
          %s142 = ssub.s32 38, %s141
          %p143 = scmp.lt.s32.totalorder %s142, 16
          %s144 = scalar_select %p143, %s142, 16
          %s145 = smul.u32 128, %s144
        $region28: #{one_layer_nn_forward_pallas.1} parent=23 // pred_fallthru
          _
      $region24: #{one_layer_nn_forward_pallas.1} parent=5 // pred_fallthru
        _
      %p146 = scmp.le.s32.totalorder 1, %s10
      %p147 = scmp.lt.s32.totalorder %s10, 4
      %p148 = pnand %p146, %p147
      %p149 = pneg %p148
      // Predicated region
      $region29: #{one_layer_nn_forward_pallas.1} parent=5 // pred_check
        _
      $region30: #{one_layer_nn_forward_pallas.1} parent=5 // pred_check_branch
        %151 = sbr.rel (%p148) target = $region32
      $region31: #{one_layer_nn_forward_pallas.1} parent=5 // pred_region
        %s152 = ssub.s32 %s10, 1
        %s153 = smul.u32 16, %s15
        %s154 = ssub.s32 38, %s153
        %p155 = scmp.lt.s32.totalorder %s154, 16
        %s156 = scalar_select %p155, %s154, 16
        %s157 = smul.u32 128, %s156
        %p158 = scmp.lt.s32.totalorder %s153, 37
        %s159 = scalar_select %p158, %s153, 37
        %s160 = smul.addr %s159, 8
        %s161 = scalar_lea.vmem %s0, %s160
        %p162 = pneg %p36
        %p163 = pneg %p33
        %p164 = pneg %p57
        %p165 = pneg %p54
        %p166 = pneg %p78
        %p167 = pneg %p75
        %p168 = pneg %p104
        %p169 = pneg %p101
        %s170 = sand.u32 %s91, 1
        %s171 = sand.u32 %s91, 1
        %s172 = smul.addr %s171, 128
        %s173 = scalar_lea.vmem [#allocation3], %s172
        %s174 = smul.u32 16, %s15
        %s175 = ssub.s32 38, %s174
        %p176 = scmp.lt.s32.totalorder %s175, 16
        %s177 = scalar_select %p176, %s175, 16
        %s178 = smul.u32 128, %s177
        %p179 = scmp.lt.s32.totalorder %s174, 37
        %s180 = scalar_select %p179, %s174, 37
        %s181 = smul.addr %s180, 8
        %s182 = scalar_lea.vmem %s0, %s181
        %s183 = smul.u32 16, %s15
        %s184 = ssub.s32 38, %s183
        %p185 = scmp.lt.s32.totalorder %s184, 16
        %s186 = scalar_select %p185, %s184, 16
        %s187 = smul.u32 128, %s186
        %s188 = smul.u32 16, %s15
        %s189 = ssub.s32 38, %s188
        %p190 = scmp.lt.s32.totalorder %s189, 16
        %s191 = scalar_select %p190, %s189, 16
        %s192 = smul.u32 128, %s191
        %v193 = vld [vmem:[%s182] sm:$0xff]
        %v194 = vld [vmem:[%s182 + $0x8] sm:$0xff]
        %v195 = vld [vmem:[%s182 + $0x10] sm:$0xff]
        %v196 = vld [vmem:[%s182 + $0x18] sm:$0xff]
        %v197 = vld [vmem:[%s182 + $0x20] sm:$0xff]
        %v198 = vld [vmem:[%s182 + $0x28] sm:$0xff]
        %v199 = vld [vmem:[%s182 + $0x30] sm:$0xff]
        %v200 = vld [vmem:[%s182 + $0x38] sm:$0xff]
        %v201 = vld [vmem:[%s182 + $0x40] sm:$0xff]
        %v202 = vld [vmem:[%s182 + $0x48] sm:$0xff]
        %v203 = vld [vmem:[%s182 + $0x50] sm:$0xff]
        %v204 = vld [vmem:[%s182 + $0x58] sm:$0xff]
        %v205 = vld [vmem:[%s182 + $0x60] sm:$0xff]
        %v206 = vld [vmem:[%s182 + $0x68] sm:$0xff]
        %v207 = vld [vmem:[%s182 + $0x70] sm:$0xff]
        %v208 = vld [vmem:[%s182 + $0x78] sm:$0xff]
        %v209 = vld [vmem:[%s1] sm:$0x1]
        %v211 = vlaneseq
        %v212 = vshrl.u32 %v211, 7
        %v213 = vsub.s32 0, %v212
        %v214 = vrot.slane %v209, %v213
        %v216 = vmul.f32 %v193, %v214
        %v217 = vmul.f32 %v194, %v214
        %v218 = vmul.f32 %v195, %v214
        %v219 = vmul.f32 %v196, %v214
        %v220 = vmul.f32 %v197, %v214
        %v221 = vmul.f32 %v198, %v214
        %v222 = vmul.f32 %v199, %v214
        %v223 = vmul.f32 %v200, %v214
        %v224 = vmul.f32 %v201, %v214
        %v225 = vmul.f32 %v202, %v214
        %v226 = vmul.f32 %v203, %v214
        %v227 = vmul.f32 %v204, %v214
        %v228 = vmul.f32 %v205, %v214
        %v229 = vmul.f32 %v206, %v214
        %v230 = vmul.f32 %v207, %v214
        %v231 = vmul.f32 %v208, %v214
        %vm232 = vcmask 89088
        %v233 = vsel %vm232, %v216, 0.0
        %234 = vadd.xlane.f32.xlu0 %v233
        %v235 = vpop.xlane.xlu0 %234
        %v236 = vsel %vm232, %v217, 0.0
        %237 = vadd.xlane.f32.xlu0 %v236
        %v238 = vpop.xlane.xlu0 %237
        %v239 = vsel %vm232, %v218, 0.0
        %240 = vadd.xlane.f32.xlu0 %v239
        %v241 = vpop.xlane.xlu0 %240
        %v242 = vsel %vm232, %v219, 0.0
        %243 = vadd.xlane.f32.xlu0 %v242
        %v244 = vpop.xlane.xlu0 %243
        %v245 = vsel %vm232, %v220, 0.0
        %246 = vadd.xlane.f32.xlu0 %v245
        %v247 = vpop.xlane.xlu0 %246
        %v248 = vsel %vm232, %v221, 0.0
        %249 = vadd.xlane.f32.xlu0 %v248
        %v250 = vpop.xlane.xlu0 %249
        %v251 = vsel %vm232, %v222, 0.0
        %252 = vadd.xlane.f32.xlu0 %v251
        %v253 = vpop.xlane.xlu0 %252
        %v254 = vsel %vm232, %v223, 0.0
        %255 = vadd.xlane.f32.xlu0 %v254
        %v256 = vpop.xlane.xlu0 %255
        %v257 = vsel %vm232, %v224, 0.0
        %258 = vadd.xlane.f32.xlu0 %v257
        %v259 = vpop.xlane.xlu0 %258
        %v260 = vsel %vm232, %v225, 0.0
        %261 = vadd.xlane.f32.xlu0 %v260
        %v262 = vpop.xlane.xlu0 %261
        %v263 = vsel %vm232, %v226, 0.0
        %264 = vadd.xlane.f32.xlu0 %v263
        %v265 = vpop.xlane.xlu0 %264
        %v266 = vsel %vm232, %v227, 0.0
        %267 = vadd.xlane.f32.xlu0 %v266
        %v268 = vpop.xlane.xlu0 %267
        %v269 = vsel %vm232, %v228, 0.0
        %270 = vadd.xlane.f32.xlu0 %v269
        %v271 = vpop.xlane.xlu0 %270
        %v272 = vsel %vm232, %v229, 0.0
        %273 = vadd.xlane.f32.xlu0 %v272
        %v274 = vpop.xlane.xlu0 %273
        %v275 = vsel %vm232, %v230, 0.0
        %276 = vadd.xlane.f32.xlu0 %v275
        %v277 = vpop.xlane.xlu0 %276
        %v278 = vsel %vm232, %v231, 0.0
        %279 = vadd.xlane.f32.xlu0 %v278
        %v280 = vpop.xlane.xlu0 %279
        %s281 = sld [smem:[#allocation2]]
        %v282 = vstv %s281
        %v283 = vadd.f32 %v235, %v282
        %v284 = vadd.f32 %v238, %v282
        %v285 = vadd.f32 %v241, %v282
        %v286 = vadd.f32 %v244, %v282
        %v287 = vadd.f32 %v247, %v282
        %v288 = vadd.f32 %v250, %v282
        %v289 = vadd.f32 %v253, %v282
        %v290 = vadd.f32 %v256, %v282
        %v291 = vadd.f32 %v259, %v282
        %v292 = vadd.f32 %v262, %v282
        %v293 = vadd.f32 %v265, %v282
        %v294 = vadd.f32 %v268, %v282
        %v295 = vadd.f32 %v271, %v282
        %v296 = vadd.f32 %v274, %v282
        %v297 = vadd.f32 %v277, %v282
        %v298 = vadd.f32 %v280, %v282
        %vm299 = vcmask 7168
        %300 = vst.msk [vmem:[%s173] sm:$0xff] %vm299, %v283
        %301 = vst.msk [vmem:[%s173 + $0x8] sm:$0xff] %vm299, %v284
        %302 = vst.msk [vmem:[%s173 + $0x10] sm:$0xff] %vm299, %v285
        %303 = vst.msk [vmem:[%s173 + $0x18] sm:$0xff] %vm299, %v286
        %304 = vst.msk [vmem:[%s173 + $0x20] sm:$0xff] %vm299, %v287
        %305 = vst.msk [vmem:[%s173 + $0x28] sm:$0xff] %vm299, %v288
        %306 = vst.msk [vmem:[%s173 + $0x30] sm:$0xff] %vm299, %v289
        %307 = vst.msk [vmem:[%s173 + $0x38] sm:$0xff] %vm299, %v290
        %308 = vst.msk [vmem:[%s173 + $0x40] sm:$0xff] %vm299, %v291
        %309 = vst.msk [vmem:[%s173 + $0x48] sm:$0xff] %vm299, %v292
        %310 = vst.msk [vmem:[%s173 + $0x50] sm:$0xff] %vm299, %v293
        %311 = vst.msk [vmem:[%s173 + $0x58] sm:$0xff] %vm299, %v294
        %312 = vst.msk [vmem:[%s173 + $0x60] sm:$0xff] %vm299, %v295
        %313 = vst.msk [vmem:[%s173 + $0x68] sm:$0xff] %vm299, %v296
        %314 = vst.msk [vmem:[%s173 + $0x70] sm:$0xff] %vm299, %v297
        %315 = vst.msk [vmem:[%s173 + $0x78] sm:$0xff] %vm299, %v298
        %s316 = sand.u32 %s91, 1
        %s317 = sand.u32 %s91, 1
        %s318 = smul.addr %s317, 128
        %s319 = scalar_lea.vmem [#allocation3], %s318
        // Predicated region
        $region33: #{one_layer_nn_forward_pallas.1} parent=31 // pred_check
          %p320 = pneg %p101
        $region34: #{one_layer_nn_forward_pallas.1} parent=31 // pred_check_branch
          %322 = sbr.rel (%p320) target = $region36
        $region35: #{one_layer_nn_forward_pallas.1} parent=31 // pred_region
          %s323 = smul.u32 16, %s15
          %s324 = ssub.s32 38, %s323
          %p325 = scmp.lt.s32.totalorder %s324, 16
          %s326 = scalar_select %p325, %s324, 16
          %s327 = smul.u32 128, %s326
          %p328 = scmp.ne.s32.totalorder 0, %s327
          %s329 = smul.addr %s323, 8
          %s330 = scalar_lea.vmem %s3, %s329
          // Predicated region
          $region37: #{one_layer_nn_forward_pallas.1} parent=35 // pred_check
            %p331 = pneg %p328
          $region38: #{one_layer_nn_forward_pallas.1} parent=35 // pred_check_branch
            %333 = sbr.rel (%p331) target = $region40
          $region39: #{one_layer_nn_forward_pallas.1} parent=35 // pred_region
            // Predicated region
            $region41: #{one_layer_nn_forward_pallas.1} parent=39 // pred_check
              _
            $region42: #{one_layer_nn_forward_pallas.1} parent=39 // pred_check_branch
              %335 = sbr.rel (0) target = $region44
            $region43: #{one_layer_nn_forward_pallas.1} parent=39 // pred_region
              // Predicated region
              $region63: #{one_layer_nn_forward_pallas.1} parent=43 // pred_check
                _
              $region64: #{one_layer_nn_forward_pallas.1} parent=43 // pred_check_branch
                %415 = sbr.rel (0) target = $region66
              $region65: #{one_layer_nn_forward_pallas.1} parent=43 // pred_region
                %s416 = sshrl.u32 %s326, 4
                // While loop
                $region67: #{one_layer_nn_forward_pallas.1} parent=65 // loop_pre_header
                  _
                $region68: #{one_layer_nn_forward_pallas.1} parent=65 // loop_header
                  %s418 = sphi 0, %s420
                  %p419 = scmp.ge.s32.totalorder %s418, %s416
                  %s423 = sphi 0, %s460
                  %s424 = sphi %s319, %s463
                  %s425 = sphi %s330, %s464
                $region69: #{one_layer_nn_forward_pallas.1} parent=65 // loop_header_branch
                  %422 = sbr.rel (%p419) target = $region73
                $region70: #{one_layer_nn_forward_pallas.1} parent=65 // loop_body
                  %v426 = vld [vmem:[%s424] sm:$0xff]
                  %427 = vst [vmem:[%s425] sm:$0xff] %v426
                  %v428 = vld [vmem:[%s424 + $0x8] sm:$0xff]
                  %429 = vst [vmem:[%s425 + $0x8] sm:$0xff] %v428
                  %v430 = vld [vmem:[%s424 + $0x10] sm:$0xff]
                  %431 = vst [vmem:[%s425 + $0x10] sm:$0xff] %v430
                  %v432 = vld [vmem:[%s424 + $0x18] sm:$0xff]
                  %433 = vst [vmem:[%s425 + $0x18] sm:$0xff] %v432
                  %v434 = vld [vmem:[%s424 + $0x20] sm:$0xff]
                  %435 = vst [vmem:[%s425 + $0x20] sm:$0xff] %v434
                  %v436 = vld [vmem:[%s424 + $0x28] sm:$0xff]
                  %437 = vst [vmem:[%s425 + $0x28] sm:$0xff] %v436
                  %v438 = vld [vmem:[%s424 + $0x30] sm:$0xff]
                  %439 = vst [vmem:[%s425 + $0x30] sm:$0xff] %v438
                  %v440 = vld [vmem:[%s424 + $0x38] sm:$0xff]
                  %441 = vst [vmem:[%s425 + $0x38] sm:$0xff] %v440
                  %v442 = vld [vmem:[%s424 + $0x40] sm:$0xff]
                  %443 = vst [vmem:[%s425 + $0x40] sm:$0xff] %v442
                  %v444 = vld [vmem:[%s424 + $0x48] sm:$0xff]
                  %445 = vst [vmem:[%s425 + $0x48] sm:$0xff] %v444
                  %v446 = vld [vmem:[%s424 + $0x50] sm:$0xff]
                  %447 = vst [vmem:[%s425 + $0x50] sm:$0xff] %v446
                  %v448 = vld [vmem:[%s424 + $0x58] sm:$0xff]
                  %449 = vst [vmem:[%s425 + $0x58] sm:$0xff] %v448
                  %v450 = vld [vmem:[%s424 + $0x60] sm:$0xff]
                  %451 = vst [vmem:[%s425 + $0x60] sm:$0xff] %v450
                  %v452 = vld [vmem:[%s424 + $0x68] sm:$0xff]
                  %453 = vst [vmem:[%s425 + $0x68] sm:$0xff] %v452
                  %v454 = vld [vmem:[%s424 + $0x70] sm:$0xff]
                  %455 = vst [vmem:[%s425 + $0x70] sm:$0xff] %v454
                  %v456 = vld [vmem:[%s424 + $0x78] sm:$0xff]
                  %457 = vst [vmem:[%s425 + $0x78] sm:$0xff] %v456
                  %s458 = sadd.s32 1, %s423
                  %p459 = scmp.ge.s32.totalorder %s458, %s416
                  %s460 = scalar_select %p459, 0, %s458
                  %s461 = smul.u32 %s460, 128
                  %s462 = smul.u32 %s460, 128
                  %s463 = scalar_lea.vmem %s319, %s461 [#allocation3]
                  %s464 = scalar_lea.vmem %s330, %s462
                $region71: #{one_layer_nn_forward_pallas.1} parent=65 // loop_footer
                  %s420 = sadd.s32 %s418, 1
                $region72: #{one_layer_nn_forward_pallas.1} parent=65 // loop_footer_branch
                  %417 = sbr.rel target = $region68
                $region73: #{one_layer_nn_forward_pallas.1} parent=65 // loop_exit
                  _
                %s465 = sshrl.u32 %s326, 4
                %s466 = sand.u32 %s326, 15
                %s467 = smul.u32 %s465, 16
                %s468 = smul.u32 8, %s467
                %s469 = scalar_lea.vmem %s319, %s468 [#allocation3]
                %s470 = smul.u32 8, %s467
                %s471 = scalar_lea.vmem %s330, %s470
                // While loop
                $region74: #{one_layer_nn_forward_pallas.1} parent=65 // loop_pre_header
                  _
                $region75: #{one_layer_nn_forward_pallas.1} parent=65 // loop_header
                  %s473 = sphi 0, %s475
                  %p474 = scmp.ge.s32.totalorder %s473, %s466
                  %s478 = sphi 0, %s485
                  %s479 = sphi %s469, %s488
                  %s480 = sphi %s471, %s489
                $region76: #{one_layer_nn_forward_pallas.1} parent=65 // loop_header_branch
                  %477 = sbr.rel (%p474) target = $region80
                $region77: #{one_layer_nn_forward_pallas.1} parent=65 // loop_body
                  %v481 = vld [vmem:[%s479] sm:$0xff]
                  %482 = vst [vmem:[%s480] sm:$0xff] %v481
                  %s483 = sadd.s32 1, %s478
                  %p484 = scmp.ge.s32.totalorder %s483, %s466
                  %s485 = scalar_select %p484, 0, %s483
                  %s486 = smul.u32 %s485, 8
                  %s487 = smul.u32 %s485, 8
                  %s488 = scalar_lea.vmem %s469, %s486 [#allocation3]
                  %s489 = scalar_lea.vmem %s471, %s487
                $region78: #{one_layer_nn_forward_pallas.1} parent=65 // loop_footer
                  %s475 = sadd.s32 %s473, 1
                $region79: #{one_layer_nn_forward_pallas.1} parent=65 // loop_footer_branch
                  %472 = sbr.rel target = $region75
                $region80: #{one_layer_nn_forward_pallas.1} parent=65 // loop_exit
                  _
              $region66: #{one_layer_nn_forward_pallas.1} parent=43 // pred_fallthru
                _
              // Predicated region
              $region81: #{one_layer_nn_forward_pallas.1} parent=43 // pred_check
                _
              $region82: #{one_layer_nn_forward_pallas.1} parent=43 // pred_check_branch
                %491 = sbr.rel target = $region84
              $region83: #{one_layer_nn_forward_pallas.1} parent=43 // pred_region
                _
              $region84: #{one_layer_nn_forward_pallas.1} parent=43 // pred_fallthru
                _
            $region44: #{one_layer_nn_forward_pallas.1} parent=39 // pred_fallthru
              _
            // Predicated region
            $region45: #{one_layer_nn_forward_pallas.1} parent=39 // pred_check
              _
            $region46: #{one_layer_nn_forward_pallas.1} parent=39 // pred_check_branch
              %337 = sbr.rel target = $region48
            $region47: #{one_layer_nn_forward_pallas.1} parent=39 // pred_region
              %s339 = ssub.s32 256, 1
              %s340 = sshrl.u32 %s326, 4
              // While loop
              $region49: #{one_layer_nn_forward_pallas.1} parent=47 // loop_pre_header
                _
              $region50: #{one_layer_nn_forward_pallas.1} parent=47 // loop_header
                %s342 = sphi 0, %s344
                %p343 = scmp.ge.s32.totalorder %s342, %s340
                %s347 = sphi 0, %s384
                %s348 = sphi %s319, %s387
                %s349 = sphi %s330, %s388
              $region51: #{one_layer_nn_forward_pallas.1} parent=47 // loop_header_branch
                %346 = sbr.rel (%p343) target = $region55
              $region52: #{one_layer_nn_forward_pallas.1} parent=47 // loop_body
                %v350 = vld [vmem:[%s348] sm:%s339]
                %351 = vst [vmem:[%s349] sm:%s339] %v350
                %v352 = vld [vmem:[%s348 + $0x8] sm:%s339]
                %353 = vst [vmem:[%s349 + $0x8] sm:%s339] %v352
                %v354 = vld [vmem:[%s348 + $0x10] sm:%s339]
                %355 = vst [vmem:[%s349 + $0x10] sm:%s339] %v354
                %v356 = vld [vmem:[%s348 + $0x18] sm:%s339]
                %357 = vst [vmem:[%s349 + $0x18] sm:%s339] %v356
                %v358 = vld [vmem:[%s348 + $0x20] sm:%s339]
                %359 = vst [vmem:[%s349 + $0x20] sm:%s339] %v358
                %v360 = vld [vmem:[%s348 + $0x28] sm:%s339]
                %361 = vst [vmem:[%s349 + $0x28] sm:%s339] %v360
                %v362 = vld [vmem:[%s348 + $0x30] sm:%s339]
                %363 = vst [vmem:[%s349 + $0x30] sm:%s339] %v362
                %v364 = vld [vmem:[%s348 + $0x38] sm:%s339]
                %365 = vst [vmem:[%s349 + $0x38] sm:%s339] %v364
                %v366 = vld [vmem:[%s348 + $0x40] sm:%s339]
                %367 = vst [vmem:[%s349 + $0x40] sm:%s339] %v366
                %v368 = vld [vmem:[%s348 + $0x48] sm:%s339]
                %369 = vst [vmem:[%s349 + $0x48] sm:%s339] %v368
                %v370 = vld [vmem:[%s348 + $0x50] sm:%s339]
                %371 = vst [vmem:[%s349 + $0x50] sm:%s339] %v370
                %v372 = vld [vmem:[%s348 + $0x58] sm:%s339]
                %373 = vst [vmem:[%s349 + $0x58] sm:%s339] %v372
                %v374 = vld [vmem:[%s348 + $0x60] sm:%s339]
                %375 = vst [vmem:[%s349 + $0x60] sm:%s339] %v374
                %v376 = vld [vmem:[%s348 + $0x68] sm:%s339]
                %377 = vst [vmem:[%s349 + $0x68] sm:%s339] %v376
                %v378 = vld [vmem:[%s348 + $0x70] sm:%s339]
                %379 = vst [vmem:[%s349 + $0x70] sm:%s339] %v378
                %v380 = vld [vmem:[%s348 + $0x78] sm:%s339]
                %381 = vst [vmem:[%s349 + $0x78] sm:%s339] %v380
                %s382 = sadd.s32 1, %s347
                %p383 = scmp.ge.s32.totalorder %s382, %s340
                %s384 = scalar_select %p383, 0, %s382
                %s385 = smul.u32 %s384, 128
                %s386 = smul.u32 %s384, 128
                %s387 = scalar_lea.vmem %s319, %s385 [#allocation3]
                %s388 = scalar_lea.vmem %s330, %s386
              $region53: #{one_layer_nn_forward_pallas.1} parent=47 // loop_footer
                %s344 = sadd.s32 %s342, 1
              $region54: #{one_layer_nn_forward_pallas.1} parent=47 // loop_footer_branch
                %341 = sbr.rel target = $region50
              $region55: #{one_layer_nn_forward_pallas.1} parent=47 // loop_exit
                _
              %s389 = sshrl.u32 %s326, 4
              %s390 = sand.u32 %s326, 15
              %s391 = smul.u32 %s389, 16
              %s392 = smul.u32 8, %s391
              %s393 = scalar_lea.vmem %s319, %s392 [#allocation3]
              %s394 = smul.u32 8, %s391
              %s395 = scalar_lea.vmem %s330, %s394
              // While loop
              $region56: #{one_layer_nn_forward_pallas.1} parent=47 // loop_pre_header
                _
              $region57: #{one_layer_nn_forward_pallas.1} parent=47 // loop_header
                %s397 = sphi 0, %s399
                %p398 = scmp.ge.s32.totalorder %s397, %s390
                %s402 = sphi 0, %s409
                %s403 = sphi %s393, %s412
                %s404 = sphi %s395, %s413
              $region58: #{one_layer_nn_forward_pallas.1} parent=47 // loop_header_branch
                %401 = sbr.rel (%p398) target = $region62
              $region59: #{one_layer_nn_forward_pallas.1} parent=47 // loop_body
                %v405 = vld [vmem:[%s403] sm:%s339]
                %406 = vst [vmem:[%s404] sm:%s339] %v405
                %s407 = sadd.s32 1, %s402
                %p408 = scmp.ge.s32.totalorder %s407, %s390
                %s409 = scalar_select %p408, 0, %s407
                %s410 = smul.u32 %s409, 8
                %s411 = smul.u32 %s409, 8
                %s412 = scalar_lea.vmem %s393, %s410 [#allocation3]
                %s413 = scalar_lea.vmem %s395, %s411
              $region60: #{one_layer_nn_forward_pallas.1} parent=47 // loop_footer
                %s399 = sadd.s32 %s397, 1
              $region61: #{one_layer_nn_forward_pallas.1} parent=47 // loop_footer_branch
                %396 = sbr.rel target = $region57
              $region62: #{one_layer_nn_forward_pallas.1} parent=47 // loop_exit
                _
            $region48: #{one_layer_nn_forward_pallas.1} parent=39 // pred_fallthru
              _
          $region40: #{one_layer_nn_forward_pallas.1} parent=35 // pred_fallthru
            _
          %492 = vnop
        $region36: #{one_layer_nn_forward_pallas.1} parent=31 // pred_fallthru
          _
      $region32: #{one_layer_nn_forward_pallas.1} parent=5 // pred_fallthru
        _
      %p493 = scmp.le.s32.totalorder 2, %s10
      // Predicated region
      $region85: #{one_layer_nn_forward_pallas.1} parent=5 // pred_check
        %p494 = pneg %p493
      $region86: #{one_layer_nn_forward_pallas.1} parent=5 // pred_check_branch
        %496 = sbr.rel (%p494) target = $region88
      $region87: #{one_layer_nn_forward_pallas.1} parent=5 // pred_region
        %s497 = ssub.s32 %s10, 2
        // Predicated region
        $region89: #{one_layer_nn_forward_pallas.1} parent=87 // pred_check
          %p498 = pneg %p107
        $region90: #{one_layer_nn_forward_pallas.1} parent=87 // pred_check_branch
          %500 = sbr.rel (%p498) target = $region92
        $region91: #{one_layer_nn_forward_pallas.1} parent=87 // pred_region
          %s501 = sand.u32 %s92, 1
          %s502 = sand.u32 %s92, 1
          %s503 = smul.addr %s502, 128
          %s504 = scalar_lea.vmem [#allocation3], %s503
        $region92: #{one_layer_nn_forward_pallas.1} parent=87 // pred_fallthru
          _
      $region88: #{one_layer_nn_forward_pallas.1} parent=5 // pred_fallthru
        _
    $region6: #{one_layer_nn_forward_pallas.1} parent=1 // loop_footer
      %s14 = sadd.s32 1, %s10
    $region7: #{one_layer_nn_forward_pallas.1} parent=1 // loop_footer_branch
      %9 = sbr.rel target = $region3
    $region8: #{one_layer_nn_forward_pallas.1} parent=1 // loop_exit
      _

</llo_original>
